<compile_context>
chip_gen: v6e
topology: v6e:2x2x1
jax: 0.10.0
libtpu: 0.0.40
codegen_flags: <defaults>
</compile_context>

<pallas_src>
import functools

import jax
import jax.numpy as jnp
from jax import lax
from jax.experimental import pallas as pl
from jax.experimental.pallas import tpu as pltpu


def _cdiv(a, b):
    return -(-a // b)


def _round_up(x, m):
    return _cdiv(x, m) * m


def _focal_loss_kernel(logits_ref, target_ref, out_ref, acc_ref, *,
                       gamma, n_total, tm, steps_per_part):
    part = pl.program_id(0)
    step = pl.program_id(1)

    @pl.when(step == 0)
    def _():
        acc_ref[...] = jnp.zeros_like(acc_ref)

    x = logits_ref[...].astype(jnp.float32)            # (tm, C)
    tgt = target_ref[...].astype(jnp.int32)            # (tm, 1)

    # log_softmax pieces along classes (lanes). Gather the target class on
    # `shifted` first so we never materialize the full (tm, C) logp tile.
    m = jnp.max(x, axis=1, keepdims=True)              # (tm, 1)
    shifted = x - m
    lse = jnp.log(jnp.sum(jnp.exp(shifted), axis=1, keepdims=True))   # (tm, 1)

    class_ids = lax.broadcasted_iota(jnp.int32, x.shape, 1)
    onehot = class_ids == tgt
    shifted_t = jnp.sum(jnp.where(onehot, shifted, 0.0), axis=1, keepdims=True)
    logp_t = shifted_t - lse                            # (tm, 1)

    p = jnp.exp(logp_t)
    one_m_p = 1.0 - p
    if gamma == 0.0:                                    # plain cross-entropy
        loss = -logp_t
    elif gamma == 1.0:
        loss = -one_m_p * logp_t
    elif gamma == 2.0:
        loss = -(one_m_p * one_m_p) * logp_t
    else:
        loss = -(one_m_p ** gamma) * logp_t             # rare path: pow via EUP

    # Mask rows past the true N (padding from ragged-N / grid rounding).
    tile_idx = part * steps_per_part + step
    row = tile_idx * tm + lax.broadcasted_iota(jnp.int32, (tm, 1), 0)
    loss = jnp.where(row < n_total, loss, 0.0)

    # Vector accumulator: no per-step cross-sublane reduce, better f32 accuracy.
    acc_ref[...] += loss

    @pl.when(step == steps_per_part - 1)
    def _():
        s = jnp.sum(acc_ref[...])
        # Lane-dense (1, 8, 128) output slab per part; wrapper reads [:, 0, 0].
        out_ref[...] = jnp.full(out_ref.shape, s, dtype=jnp.float32)


def focal_loss(logits, target, *, gamma=1.0, reduction="mean",
               tm=None, num_parts=2):
    """Focal loss. logits: (N, C) float (f32 or bf16), target: (N,) int."""
    n, c = logits.shape
    dtype_bytes = jnp.dtype(logits.dtype).itemsize
    row_align = 16 if dtype_bytes == 2 else 8           # bf16 packs 16 sublanes

    if tm is None:
        # ~12 MiB budget for 2 DMA buffers of the logits tile + ~3 f32 temps.
        budget = 12 * 1024 * 1024
        per_row = c * (2 * dtype_bytes + 3 * 4) + 64
        tm = max(row_align, min(budget // per_row, 1024))
    # Never tile wider than this problem needs.
    tm = min(tm, _round_up(_cdiv(n, max(num_parts, 1)), row_align))
    tm = max(row_align, (tm // row_align) * row_align)
    assert tm % row_align == 0

    total_tiles = _cdiv(n, tm)
    num_parts = max(1, min(num_parts, total_tiles))
    steps_per_part = _cdiv(total_tiles, num_parts)
    n_pad = num_parts * steps_per_part * tm

    target2d = target.astype(jnp.int32).reshape(n, 1)
    if n_pad != n:
        logits = jnp.pad(logits, ((0, n_pad - n), (0, 0)))
        target2d = jnp.pad(target2d, ((0, n_pad - n), (0, 0)))

    kernel = functools.partial(_focal_loss_kernel, gamma=gamma, n_total=n,
                               tm=tm, steps_per_part=steps_per_part)

    partials = pl.pallas_call(
        kernel,
        out_shape=jax.ShapeDtypeStruct((num_parts, 8, 128), jnp.float32),
        grid_spec=pltpu.PrefetchScalarGridSpec(
            num_scalar_prefetch=0,
            grid=(num_parts, steps_per_part),
            in_specs=[
                pl.BlockSpec((tm, c), lambda p, i: (p * steps_per_part + i, 0)),
                pl.BlockSpec((tm, 1), lambda p, i: (p * steps_per_part + i, 0)),
            ],
            out_specs=pl.BlockSpec((1, 8, 128), lambda p, i: (p, 0, 0)),
            scratch_shapes=[pltpu.VMEM((tm, 1), jnp.float32)],
        ),
        compiler_params=pltpu.CompilerParams(
            # Outer row-part axis shards across TensorCores (v7x megacore);
            # inner axis accumulates into scratch, so it must stay "arbitrary".
            dimension_semantics=("parallel", "arbitrary"),
            vmem_limit_bytes=32 * 1024 * 1024,
        ),
    )(logits, target2d)

    total = jnp.sum(partials[:, 0, 0])
    if reduction == "mean":
        return total / jnp.float32(n)
    elif reduction == "sum":
        return total
    else:
        # TODO(synk): reduction='none' (per-sample output) not implemented here.
        raise NotImplementedError("reduction='none' is not supported by this kernel")


def focal_loss_ref(logits, target, gamma=1.0):
    logp = jax.nn.log_softmax(logits.astype(jnp.float32), axis=1)
    logp_t = jnp.take_along_axis(logp, target.reshape(-1, 1), axis=1)[:, 0]
    p = jnp.exp(logp_t)
    return jnp.mean(-((1.0 - p) ** gamma) * logp_t)


if __name__ == "__main__":
    key = jax.random.PRNGKey(0)

    # Case 1: small, aligned (matches the module spec: (n, n_classes) logits).
    k1, k2, k3, k4 = jax.random.split(key, 4)
    N, C = 8, 32
    logits = jax.random.normal(k1, (N, C), dtype=jnp.float32)
    target = jax.random.randint(k2, (N,), 0, C, dtype=jnp.int32)
    out = jax.block_until_ready(focal_loss(logits, target, gamma=1.0))
    ref = focal_loss_ref(logits, target, gamma=1.0)
    assert jnp.allclose(out, ref, atol=1e-5, rtol=1e-5), (out, ref)

    # Case 2: ragged N (exercises padding/masking and the 2-part parallel split).
    N2, C2 = 37, 32
    logits2 = jax.random.normal(k3, (N2, C2), dtype=jnp.float32)
    target2 = jax.random.randint(k4, (N2,), 0, C2, dtype=jnp.int32)
    out2 = jax.block_until_ready(focal_loss(logits2, target2, gamma=1.0))
    ref2 = focal_loss_ref(logits2, target2, gamma=1.0)
    assert jnp.allclose(out2, ref2, atol=1e-5, rtol=1e-5), (out2, ref2)

    print("KERNEL_OK")
</pallas_src>

<mosaic_0001>
module attributes {stable_mosaic.version = 11 : i64} {
  func.func @_focal_loss_kernel(%arg0: i32, %arg1: i32, %arg2: memref<8x32xf32, #tpu.memory_space<vmem>>, %arg3: memref<8x1xi32, #tpu.memory_space<vmem>>, %arg4: memref<1x8x128xf32, #tpu.memory_space<vmem>>, %arg5: memref<8x1xf32, #tpu.memory_space<vmem>>) attributes {dimension_semantics = [#tpu.dimension_semantics<parallel>, #tpu.dimension_semantics<arbitrary>], iteration_bounds = array<i64: 1, 1>, scalar_prefetch = 0 : i64, scratch_operands = 1 : i64, tpu.core_type = #tpu.core_type<tc>, window_params = [{transform_indices = @transform_0, window_bounds = array<i64: 8, 32>}, {transform_indices = @transform_1, window_bounds = array<i64: 8, 1>}, {transform_indices = @transform_2, window_bounds = array<i64: 1, 8, 128>}]} {
    %c0_i32 = arith.constant 0 : i32
    %0 = arith.cmpi eq, %arg1, %c0_i32 : i32
    %1 = arith.extui %0 : i1 to i32
    %c0_i32_0 = arith.constant 0 : i32
    %2 = arith.cmpi ne, %1, %c0_i32_0 : i32
    scf.if %2 {
      %cst_17 = arith.constant 0.000000e+00 : f32
      %43 = vector.broadcast %cst_17 : f32 to vector<8x1xf32>
      %c0_18 = arith.constant 0 : index
      %c0_19 = arith.constant 0 : index
      %44 = vector.load %arg5[%c0_18, %c0_19] : memref<8x1xf32, #tpu.memory_space<vmem>>, vector<8x1xf32>
      tpu.vector_store %arg5[%c0_18, %c0_19], %43 {strides = array<i32>} : memref<8x1xf32, #tpu.memory_space<vmem>>, vector<8x1xf32>,
    } else {
    }
    %c0 = arith.constant 0 : index
    %c0_1 = arith.constant 0 : index
    %3 = vector.load %arg2[%c0, %c0_1] : memref<8x32xf32, #tpu.memory_space<vmem>>, vector<8x32xf32>
    %c0_2 = arith.constant 0 : index
    %c0_3 = arith.constant 0 : index
    %4 = vector.load %arg3[%c0_2, %c0_3] : memref<8x1xi32, #tpu.memory_space<vmem>>, vector<8x1xi32>
    %cst = arith.constant dense<0xFF800000> : vector<8xf32>
    %5 = vector.multi_reduction <maximumf>, %3, %cst [1] : vector<8x32xf32> to vector<8xf32>
    %6 = vector.shape_cast %5 : vector<8xf32> to vector<8x1xf32>
    %7 = vector.broadcast %6 : vector<8x1xf32> to vector<8x32xf32>
    %8 = arith.subf %3, %7 : vector<8x32xf32>
    %9 = math.exp %8 : vector<8x32xf32>
    %cst_4 = arith.constant dense<0.000000e+00> : vector<8xf32>
    %10 = vector.multi_reduction <add>, %9, %cst_4 [1] : vector<8x32xf32> to vector<8xf32>
    %11 = vector.shape_cast %10 : vector<8xf32> to vector<8x1xf32>
    %12 = math.log %11 : vector<8x1xf32>
    %13 = tpu.iota {dimensions = array<i32: 1>} : vector<8x32xi32>
    %14 = vector.broadcast %4 : vector<8x1xi32> to vector<8x32xi32>
    %15 = arith.cmpi eq, %13, %14 : vector<8x32xi32>
    %cst_5 = arith.constant 0.000000e+00 : f32
    %16 = vector.broadcast %cst_5 : f32 to vector<8x32xf32>
    %17 = arith.select %15, %8, %16 : vector<8x32xi1>, vector<8x32xf32>
    %cst_6 = arith.constant dense<0.000000e+00> : vector<8xf32>
    %18 = vector.multi_reduction <add>, %17, %cst_6 [1] : vector<8x32xf32> to vector<8xf32>
    %19 = vector.shape_cast %18 : vector<8xf32> to vector<8x1xf32>
    %20 = arith.subf %19, %12 : vector<8x1xf32>
    %21 = math.exp %20 : vector<8x1xf32>
    %cst_7 = arith.constant 1.000000e+00 : f32
    %22 = vector.broadcast %cst_7 : f32 to vector<8x1xf32>
    %23 = arith.subf %22, %21 : vector<8x1xf32>
    %cst_8 = arith.constant 0.000000e+00 : f32
    %24 = vector.broadcast %cst_8 : f32 to vector<8x1xf32>
    %25 = arith.subf %24, %23 : vector<8x1xf32>
    %26 = arith.mulf %25, %20 : vector<8x1xf32>
    %c1_i32 = arith.constant 1 : i32
    %27 = arith.muli %arg0, %c1_i32 : i32
    %28 = arith.addi %27, %arg1 : i32
    %c8_i32 = arith.constant 8 : i32
    %29 = arith.muli %28, %c8_i32 : i32
    %30 = tpu.iota {dimensions = array<i32: 0>} : vector<8x1xi32>
    %31 = vector.broadcast %29 : i32 to vector<8x1xi32>
    %32 = arith.addi %31, %30 : vector<8x1xi32>
    %c8_i32_9 = arith.constant 8 : i32
    %33 = vector.broadcast %c8_i32_9 : i32 to vector<8x1xi32>
    %34 = arith.cmpi slt, %32, %33 : vector<8x1xi32>
    %cst_10 = arith.constant 0.000000e+00 : f32
    %35 = vector.broadcast %cst_10 : f32 to vector<8x1xf32>
    %36 = arith.select %34, %26, %35 : vector<8x1xi1>, vector<8x1xf32>
    %c0_11 = arith.constant 0 : index
    %c0_12 = arith.constant 0 : index
    %37 = vector.load %arg5[%c0_11, %c0_12] : memref<8x1xf32, #tpu.memory_space<vmem>>, vector<8x1xf32>
    %38 = arith.addf %37, %36 : vector<8x1xf32>
    %c0_13 = arith.constant 0 : index
    %c0_14 = arith.constant 0 : index
    %39 = vector.load %arg5[%c0_13, %c0_14] : memref<8x1xf32, #tpu.memory_space<vmem>>, vector<8x1xf32>
    tpu.vector_store %arg5[%c0_13, %c0_14], %38 {strides = array<i32>} : memref<8x1xf32, #tpu.memory_space<vmem>>, vector<8x1xf32>,
    %c0_i32_15 = arith.constant 0 : i32
    %40 = arith.cmpi eq, %arg1, %c0_i32_15 : i32
    %41 = arith.extui %40 : i1 to i32
    %c0_i32_16 = arith.constant 0 : i32
    %42 = arith.cmpi ne, %41, %c0_i32_16 : i32
    scf.if %42 {
      %c0_17 = arith.constant 0 : index
      %c0_18 = arith.constant 0 : index
      %43 = vector.load %arg5[%c0_17, %c0_18] : memref<8x1xf32, #tpu.memory_space<vmem>>, vector<8x1xf32>
      %44 = vector.shape_cast %43 : vector<8x1xf32> to vector<1x8x1xf32>
      %cst_19 = arith.constant dense<0.000000e+00> : vector<1xf32>
      %45 = vector.multi_reduction <add>, %44, %cst_19 [1, 2] : vector<1x8x1xf32> to vector<1xf32>
      %46 = vector.shape_cast %45 : vector<1xf32> to vector<1x1x1xf32>
      %47 = vector.extract %46[0, 0, 0] : f32 from vector<1x1x1xf32>
      %48 = vector.broadcast %47 : f32 to vector<1x8x128xf32>
      %c0_20 = arith.constant 0 : index
      %c0_21 = arith.constant 0 : index
      %c0_22 = arith.constant 0 : index
      %49 = vector.load %arg4[%c0_20, %c0_21, %c0_22] : memref<1x8x128xf32, #tpu.memory_space<vmem>>, vector<1x8x128xf32>
      tpu.vector_store %arg4[%c0_20, %c0_21, %c0_22], %48 {strides = array<i32>} : memref<1x8x128xf32, #tpu.memory_space<vmem>>, vector<1x8x128xf32>,
    } else {
    }
    return
  }
  func.func @transform_0(%arg0: i32, %arg1: i32) -> (i32, i32) {
    %c1_i32 = arith.constant 1 : i32
    %0 = arith.muli %arg0, %c1_i32 : i32
    %1 = arith.addi %0, %arg1 : i32
    %c0_i32 = arith.constant 0 : i32
    %c0_i32_0 = arith.constant 0 : i32
    return %1, %c0_i32 : i32, i32
  }
  func.func @transform_1(%arg0: i32, %arg1: i32) -> (i32, i32) {
    %c1_i32 = arith.constant 1 : i32
    %0 = arith.muli %arg0, %c1_i32 : i32
    %1 = arith.addi %0, %arg1 : i32
    %c0_i32 = arith.constant 0 : i32
    %c0_i32_0 = arith.constant 0 : i32
    return %1, %c0_i32 : i32, i32
  }
  func.func @transform_2(%arg0: i32, %arg1: i32) -> (i32, i32, i32) {
    %c0_i32 = arith.constant 0 : i32
    %c0_i32_0 = arith.constant 0 : i32
    %c0_i32_1 = arith.constant 0 : i32
    return %arg0, %c0_i32, %c0_i32_0 : i32, i32, i32
  }
}

</mosaic_0001>

<llo_original>
// kernel: tpu_custom_call.1
$region0: #{tpu_custom_call.1}
  #allocation0 [shape = 'u32[]', space=smem, size = 0x4, offset = 0x4, fixed_abs, tag = 'smem constant byte address 0x4 - core index']
  #allocation1 [shape = 'u32[144,128]{1,0:T(1,128)}', space=vmem, size = 0x12000, scoped, tag = 'internal scratch']
  #allocation2 [shape = 'f32[8,1]{1,0:T(8,128)}', space=vmem, size = 0x1000, scoped, tag = 'scratch operand']
  %s0 = inlined_call_operand.vmem [shape: f32[8,32], index: 0, kind: input, shape index: {}]
  %s1 = inlined_call_operand.vmem [shape: s32[8,1], index: 1, kind: input, shape index: {}]
  %s2 = inlined_call_operand.hbm [shape: f32[1,8,128], index: 2, kind: output, shape index: {}]
  %s3 = sld [smem:[#allocation0]]
  $region26: #{tpu_custom_call.1} parent=0
    _
  %s5 = ssub.s32 1, %s3
  %s6 = scalar_select 0, %s5, %s3
  $region1: #{tpu_custom_call.1} parent=0
    #allocation3 [shape = 'u8[4096]{0}', space=vmem, size = 0x1000, scoped, tag = 'output window, operand 0, single buffered']
    #allocation4 [shape = 's32[1]{0}', space=sflag, size = 0x4, scoped, tag = 'scoped memory for tpu_custom_call.1']
    %7 = vsyncpa [#allocation4], 0
    // Predicated region
    $region2: #{tpu_custom_call.1} parent=1 // pred_check
      _
    $region3: #{tpu_custom_call.1} parent=1 // pred_check_branch
      %9 = sbr.rel (0) target = $region5
    $region4: #{tpu_custom_call.1} parent=1 // pred_region
      %s10 = sadd.s32 0, 0
      %p11 = scmp.lt.s32.totalorder %s10, 0
      %s12 = scalar_select %p11, %s10, 0
      %s13 = smul.addr %s12, 8
      %s14 = scalar_lea.vmem %s0, %s13
      %s15 = sadd.s32 0, 0
    $region5: #{tpu_custom_call.1} parent=1 // pred_fallthru
      _
    // Predicated region
    $region6: #{tpu_custom_call.1} parent=1 // pred_check
      _
    $region7: #{tpu_custom_call.1} parent=1 // pred_check_branch
      %17 = sbr.rel (0) target = $region9
    $region8: #{tpu_custom_call.1} parent=1 // pred_region
      %s18 = sadd.s32 0, 0
      %p19 = scmp.lt.s32.totalorder %s18, 0
      %s20 = scalar_select %p19, %s18, 0
      %s21 = smul.addr %s20, 8
      %s22 = scalar_lea.vmem %s1, %s21
      %s23 = sadd.s32 0, 0
    $region9: #{tpu_custom_call.1} parent=1 // pred_fallthru
      _
    %s24 = sadd.s32 0, 0
    %p25 = scmp.lt.s32.totalorder %s24, 0
    %s26 = scalar_select %p25, %s24, 0
    %s27 = smul.addr %s26, 8
    %s28 = scalar_lea.vmem %s0, %s27
    %s29 = sadd.s32 0, 0
    %p30 = scmp.lt.s32.totalorder %s29, 0
    %s31 = scalar_select %p30, %s29, 0
    %s32 = smul.addr %s31, 8
    %s33 = scalar_lea.vmem %s1, %s32
    %s34 = sadd.s32 0, 0
    %p35 = scmp.lt.s32.totalorder %s34, 0
    %s36 = scalar_select %p35, %s34, 0
    %s37 = smul.addr %s36, 8
    %s38 = scalar_lea.vmem %s0, %s37
    %s39 = sadd.s32 0, 0
    %s40 = sadd.s32 0, 0
    %p41 = scmp.lt.s32.totalorder %s40, 0
    %s42 = scalar_select %p41, %s40, 0
    %s43 = smul.addr %s42, 8
    %s44 = scalar_lea.vmem %s1, %s43
    %s45 = sadd.s32 0, 0
    %p46 = scmp.eq.s32.totalorder 0, 0
    // Predicated region
    $region10: #{tpu_custom_call.1} parent=1 // pred_check
      %p47 = pneg %p46
    $region11: #{tpu_custom_call.1} parent=1 // pred_check_branch
      %49 = sbr.rel (%p47) target = $region13
    $region12: #{tpu_custom_call.1} parent=1 // pred_region
      %vm50 = vcmask 7168
      %51 = vst.msk [vmem:[#allocation2] sm:$0xff] %vm50, 0.0
    $region13: #{tpu_custom_call.1} parent=1 // pred_fallthru
      _
    %v52 = vld [vmem:[%s38] sm:$0xff]
    %v53 = vld [vmem:[%s44] sm:$0xff]
    %vm54 = vcmask 261120
    %v55 = vsel %vm54, %v52, -inf
    %56 = vmax.xlane.f32.xlu0 %v55
    %v57 = vpop.xlane.xlu0 %56
    %v58 = vsub.f32 %v52, %v57
    %v59 = vmul.f32 %v58, 1.442695
    %v60 = vpow.pop %v59
    %v61 = vsel %vm54, %v60, 0.0
    %62 = vadd.xlane.f32.xlu0 %v61
    %v63 = vpop.xlane.xlu0 %62
    %v64 = vlog2.pop %v63
    %v65 = vmul.f32 %v64, 0.6931472
    %v66 = vlaneseq
    %v67 = vand.u32 %v66, 127
    %68 = vset.pattern.permute.xlu0 0
    %69 = vperm.xlu0 %68, %v53
    %v70 = vpop.permute.xlu0 %69
    %vm71 = vcmp.eq.s32.totalorder %v67, %v70
    %v72 = vsel %vm71, %v58, 0.0
    %v73 = vsel %vm54, %v72, 0.0
    %74 = vadd.xlane.f32.xlu0 %v73
    %v75 = vpop.xlane.xlu0 %74
    %v76 = vsub.f32 %v75, %v65
    %v77 = vmul.f32 %v76, 1.442695
    %v78 = vpow.pop %v77
    %v79 = vsub.f32 1.0, %v78
    %v80 = vsub.f32 0.0, %v79
    %v81 = vmul.f32 %v80, %v76
    %s82 = sadd.s32 0, 0
    %s83 = smul.u32 %s82, 8
    %v84 = vlaneseq
    %v85 = vshrl.u32 %v84, 7
    %v86 = vstv %s83
    %v87 = vadd.s32 %v86, %v85
    %vm88 = vcmp.lt.s32.totalorder %v87, 8
    %v89 = vsel %vm88, %v81, 0.0
    %v90 = vld [vmem:[#allocation2] sm:$0xff]
    %v91 = vadd.f32 %v90, %v89
    %vm92 = vcmask 7168
    %93 = vst.msk [vmem:[#allocation2] sm:$0xff] %vm92, %v91
    // Predicated region
    $region14: #{tpu_custom_call.1} parent=1 // pred_check
      %p94 = pneg %p46
    $region15: #{tpu_custom_call.1} parent=1 // pred_check_branch
      %96 = sbr.rel (%p94) target = $region17
    $region16: #{tpu_custom_call.1} parent=1 // pred_region
      %v97 = vld [vmem:[#allocation2] sm:$0xff]
      %v98 = vsel %vm92, %v97, 0.0
      %99 = vadd.xlane.f32.xlu0 %v98
      %v100 = vpop.xlane.xlu0 %99
      %v101 = vrot.slane %v100, 4
      %v102 = vadd.f32 %v100, %v101
      %v103 = vrot.slane %v102, 2
      %v104 = vadd.f32 %v102, %v103
      %v105 = vrot.slane %v104, 1
      %v106 = vadd.f32 %v104, %v105
      %s107 = vtos %v106
      %v108 = vstv %s107
      %109 = vst [vmem:[#allocation3] sm:$0xff] %v108
    $region17: #{tpu_custom_call.1} parent=1 // pred_fallthru
      _
    // Predicated region
    $region18: #{tpu_custom_call.1} parent=1 // pred_check
      _
    $region19: #{tpu_custom_call.1} parent=1 // pred_check_branch
      %111 = sbr.rel (0) target = $region21
    $region20: #{tpu_custom_call.1} parent=1 // pred_region
      %s113 = ssub.s32 128, 128
      %114 = vsyncadd [#allocation4], %s113
      %s116 = sshll.u32 [#allocation3], 4
      %s117 = int_to_ptr.vmem [resolvable:$true] %s116
      %119 = dma.vmem_to_hbm [thread:$0]  %s117, 128, %s2, [#allocation4]
    $region21: #{tpu_custom_call.1} parent=1 // pred_fallthru
      _
    // Predicated region
    $region22: #{tpu_custom_call.1} parent=1 // pred_check
      _
    $region23: #{tpu_custom_call.1} parent=1 // pred_check_branch
      %121 = sbr.rel (0) target = $region25
    $region24: #{tpu_custom_call.1} parent=1 // pred_region
      %122 = dma.done [#allocation4], 128
    $region25: #{tpu_custom_call.1} parent=1 // pred_fallthru
      _
    %123 = vsyncpa [#allocation4], 1

</llo_original>
